<compile_context>
chip_gen: v6e
topology: v6e:2x2x1
jax: 0.10.0
libtpu: 0.0.40
codegen_flags: <defaults>
</compile_context>

<pallas_src>
import numpy as np
import jax
import jax.numpy as jnp
from jax import lax
from jax.experimental import pallas as pl
from jax.experimental.pallas import tpu as pltpu

_LANES = 128
_VMEM_BLOCK_BUDGET = 28 * 1024 * 1024   # bytes for double-buffered block traffic
_VMEM_LIMIT_BYTES = 48 * 1024 * 1024    # > 32 MiB scoped default, < 64 MiB v7x physical


def _round_down8(x):
    return max(8, (x // 8) * 8)


def _pick_tile_rows(n_rows, bytes_per_row):
    """Largest VMEM-fitting row tile (multiple of 8), or the full extent."""
    cap = _round_down8(_VMEM_BLOCK_BUDGET // max(int(bytes_per_row), 1))
    return n_rows if n_rows <= cap else cap


# ----------------------------------------------------------------------------
# Kernel 1: masked per-layer sum / sum-of-squares (only when do_layer_norm)
# ----------------------------------------------------------------------------
def _make_stats_kernel(num_layers, n_rows, tile_rows):
    ragged = (n_rows % tile_rows) != 0

    def kernel(m_ref, *rest):
        x_refs = rest[:num_layers]            # K × (TN, D) tiles, native dtype
        out_ref = rest[num_layers]            # (K, 2) resident output
        s1_ref, s2_ref = rest[num_layers + 1:]  # (K, 8, D) f32 scratches
        step = pl.program_id(0)

        @pl.when(step == 0)
        def _():
            s1_ref[...] = jnp.zeros_like(s1_ref)
            s2_ref[...] = jnp.zeros_like(s2_ref)

        m = m_ref[...].astype(jnp.float32)                      # (TN, 1)
        if ragged:
            row = lax.broadcasted_iota(jnp.int32, m.shape, 0)
            valid = (step * tile_rows + row) < n_rows           # (TN, 1)

        tn = m.shape[0]
        for k in range(num_layers):                             # K small -> unrolled
            xm = x_refs[k][...].astype(jnp.float32) * m         # (TN, D)
            if ragged:
                xm = jnp.where(valid, xm, 0.0)                  # kill OOB-pad garbage
            if tn % 8 == 0:
                r = xm.reshape(tn // 8, 8, xm.shape[-1])
                s1_ref[k] = s1_ref[k] + jnp.sum(r, axis=0)      # vreg-wise adds
                s2_ref[k] = s2_ref[k] + jnp.sum(r * r, axis=0)
            else:  # single full-extent block whose row count is not a multiple of 8
                s1_ref[k, 0:1, :] = s1_ref[k, 0:1, :] + jnp.sum(xm, axis=0, keepdims=True)
                s2_ref[k, 0:1, :] = s2_ref[k, 0:1, :] + jnp.sum(xm * xm, axis=0,
                                                                keepdims=True)

        @pl.when(step == pl.num_programs(0) - 1)
        def _():
            out_ref[...] = jnp.stack(
                [jnp.sum(s1_ref[...], axis=(1, 2)),
                 jnp.sum(s2_ref[...], axis=(1, 2))], axis=1)

    return kernel


def _masked_stats(xs_nd, mask_n1):
    k = len(xs_nd)
    n, d = xs_nd[0].shape
    in_bytes = sum(x.dtype.itemsize for x in xs_nd)
    bytes_per_row = 2 * (d * in_bytes + 4)          # K tensors + f32 mask col, 2-buffered
    tile_rows = _pick_tile_rows(n, bytes_per_row)
    grid = (pl.cdiv(n, tile_rows),)
    in_specs = [pl.BlockSpec((tile_rows, 1), lambda i: (i, 0))]
    in_specs += [pl.BlockSpec((tile_rows, d), lambda i: (i, 0)) for _ in range(k)]
    return pl.pallas_call(
        _make_stats_kernel(k, n, tile_rows),
        out_shape=jax.ShapeDtypeStruct((k, 2), jnp.float32),
        grid=grid,
        in_specs=in_specs,
        out_specs=pl.BlockSpec((k, 2), lambda i: (0, 0)),
        scratch_shapes=[pltpu.VMEM((k, 8, d), jnp.float32),
                        pltpu.VMEM((k, 8, d), jnp.float32)],
        compiler_params=pltpu.CompilerParams(
            dimension_semantics=("arbitrary",),
            vmem_limit_bytes=_VMEM_LIMIT_BYTES),
        # TODO(synk): on v7x the stats pass could additionally be sharded over K
        # across the 2 TensorCores; that needs a stacked (K,N,D) layout which we
        # avoid to save the extra HBM pass.
    )(mask_n1, *xs_nd)


# ----------------------------------------------------------------------------
# Kernel 2: lane-dense elementwise mixture  out = c + sum_k a_k * x_k
# ----------------------------------------------------------------------------
def _make_mix_kernel(num_layers):
    def kernel(params_ref, *refs):
        x_refs = refs[:num_layers]            # K × (TR, 128) tiles, native dtype
        out_ref = refs[num_layers]            # (TR, 128) tile, native dtype
        # bias c (exactly 0 when do_layer_norm=False), broadcast once per tile
        acc = jnp.full(out_ref.shape, params_ref[num_layers], jnp.float32)
        for k in range(num_layers):           # K small & static -> unrolled MACs
            acc = acc + params_ref[k] * x_refs[k][...].astype(jnp.float32)
        out_ref[...] = acc.astype(out_ref.dtype)
    return kernel


def _mix(params, xs_2d, out_dtype):
    k = len(xs_2d)
    rows, lanes = xs_2d[0].shape
    in_bytes = sum(x.dtype.itemsize for x in xs_2d)
    out_bytes = jnp.dtype(out_dtype).itemsize
    bytes_per_row = 2 * lanes * (in_bytes + out_bytes)   # double-buffered blocks
    tile_rows = _pick_tile_rows(rows, bytes_per_row)
    grid = (pl.cdiv(rows, tile_rows),)
    in_specs = [pl.BlockSpec(memory_space=pltpu.SMEM)]   # (K+1,) scalar coefficients
    in_specs += [pl.BlockSpec((tile_rows, lanes), lambda i: (i, 0)) for _ in range(k)]
    return pl.pallas_call(
        _make_mix_kernel(k),
        out_shape=jax.ShapeDtypeStruct((rows, lanes), out_dtype),
        grid=grid,
        in_specs=in_specs,
        out_specs=pl.BlockSpec((tile_rows, lanes), lambda i: (i, 0)),
        compiler_params=pltpu.CompilerParams(
            dimension_semantics=("parallel",),
            vmem_limit_bytes=_VMEM_LIMIT_BYTES),
    )(params, *xs_2d)


# ----------------------------------------------------------------------------
# Module forward
# ----------------------------------------------------------------------------
def scalar_mix_with_dropout(
    tensors,                      # list of K arrays, identical shape (..., D)
    scalar_parameters,            # (K,) unnormalized mixture weights
    gamma,                        # scalar
    mask=None,                    # (...,) matching tensors[0].shape[:-1]
    do_layer_norm=False,
    dropout=None,
    dropout_value=-1e20,
    training=False,
    rng=None,
    out_dtype=None,               # default: same dtype as the input tensors
):
    """Forward pass of ScalarMixWithDropout (Pallas on TPU)."""
    k = len(tensors)
    lead_shape = tensors[0].shape
    d = lead_shape[-1]
    n = int(np.prod(lead_shape[:-1]))
    if out_dtype is None:
        out_dtype = tensors[0].dtype

    # --- tiny scalar glue: softmax over K weights + optional weight dropout ---
    weights = jnp.asarray(scalar_parameters, jnp.float32).reshape(k)
    if training and dropout:
        u = jax.random.uniform(rng, (k,))
        weights = jnp.where(u > dropout, weights,
                            jnp.full((k,), dropout_value, jnp.float32))
    normed_w = jax.nn.softmax(weights)
    gamma_f = jnp.asarray(gamma, jnp.float32).reshape(())

    if do_layer_norm:
        if mask is None:
            raise ValueError("mask is required when do_layer_norm=True")
        mask_f = mask.astype(jnp.float32).reshape(n, 1)
        xs_nd = [t.reshape(n, d) for t in tensors]           # free views, native dtype
        stats = _masked_stats(xs_nd, mask_f)                 # (K, 2) in-kernel reduction
        n_elem = jnp.sum(mask_f) * d
        mean = stats[:, 0] / n_elem
        var = stats[:, 1] / n_elem - mean * mean             # E[x^2]-mu^2 (f32, wide acc)
        inv_std = lax.rsqrt(var + 1e-12)
        a = gamma_f * normed_w * inv_std                     # per-layer scale
        c = -jnp.sum(a * mean)                               # single folded bias
    else:
        a = gamma_f * normed_w
        c = jnp.zeros((), jnp.float32)

    params = jnp.concatenate([a, c.reshape(1)]).astype(jnp.float32)   # (K+1,) -> SMEM

    # --- lane-dense (rows, 128) view of every tensor for the hot path ---
    total = n * d
    rows = (total + _LANES - 1) // _LANES
    padded = rows * _LANES

    def to_2d(t):
        flat = t.reshape(-1)                 # free reshape (row-major order kept)
        if padded != total:                  # only when numel % 128 != 0
            flat = jnp.pad(flat, (0, padded - total))
        return flat.reshape(rows, _LANES)

    out2d = _mix(params, [to_2d(t) for t in tensors], out_dtype)
    out = out2d.reshape(-1)
    if padded != total:
        out = out[:total]
    return out.reshape(lead_shape)


# ----------------------------------------------------------------------------
# Pure-JAX reference (direct transcription of the PyTorch forward)
# ----------------------------------------------------------------------------
def _reference(tensors, scalar_parameters, gamma, mask=None, do_layer_norm=False):
    w = jax.nn.softmax(jnp.asarray(scalar_parameters, jnp.float32))
    if not do_layer_norm:
        return gamma * sum(w[i] * tensors[i] for i in range(len(tensors)))
    mask_f = mask.astype(jnp.float32)
    bmask = mask_f[..., None]
    d = tensors[0].shape[-1]
    n = jnp.sum(mask_f) * d
    pieces = []
    for i, t in enumerate(tensors):
        tm = t * bmask
        mean = jnp.sum(tm) / n
        var = jnp.sum(((tm - mean) * bmask) ** 2) / n
        pieces.append(w[i] * (t - mean) / jnp.sqrt(var + 1e-12))
    return gamma * sum(pieces)


# ----------------------------------------------------------------------------
if __name__ == "__main__":
    # Module config (deterministic __init__-style parameters).
    K = 4                               # mixture_size
    B, T, D = 2, 8, 32                  # batch, timesteps, hidden
    initial_scalar_parameters = jnp.array([0.1, -0.2, 0.3, 0.0], jnp.float32)
    gamma = 1.0

    key = jax.random.PRNGKey(0)
    keys = jax.random.split(key, K)
    tensors = [jax.random.normal(keys[i], (B, T, D), jnp.float32) for i in range(K)]
    # Boolean padding mask, (B, T): some trailing positions masked out.
    lengths = jnp.array([8, 5], jnp.int32)
    mask = (jnp.arange(T)[None, :] < lengths[:, None])

    # --- path 1: do_layer_norm=False (eval mode, no dropout) ---
    out_plain = scalar_mix_with_dropout(
        tensors, initial_scalar_parameters, gamma, do_layer_norm=False)
    ref_plain = _reference(tensors, initial_scalar_parameters, gamma,
                           do_layer_norm=False)

    # --- path 2: do_layer_norm=True with mask ---
    out_ln = scalar_mix_with_dropout(
        tensors, initial_scalar_parameters, gamma, mask=mask, do_layer_norm=True)
    ref_ln = _reference(tensors, initial_scalar_parameters, gamma,
                        mask=mask, do_layer_norm=True)

    # --- path 3: bf16 I/O (native dtype in & out, f32 compute in-kernel) ---
    tensors_bf16 = [t.astype(jnp.bfloat16) for t in tensors]
    out_bf16 = scalar_mix_with_dropout(
        tensors_bf16, initial_scalar_parameters, gamma, do_layer_norm=False)

    jax.block_until_ready((out_plain, out_ln, out_bf16))

    assert out_plain.shape == (B, T, D) and out_ln.shape == (B, T, D)
    assert out_bf16.dtype == jnp.bfloat16
    assert np.allclose(np.asarray(out_plain), np.asarray(ref_plain),
                       rtol=1e-5, atol=1e-5)
    assert np.allclose(np.asarray(out_ln), np.asarray(ref_ln),
                       rtol=1e-5, atol=1e-5)
    assert np.allclose(np.asarray(out_bf16.astype(jnp.float32)),
                       np.asarray(ref_plain), rtol=5e-2, atol=5e-2)
    print("KERNEL_OK")
</pallas_src>

<mosaic_0001>
module attributes {stable_mosaic.version = 11 : i64} {
  func.func @kernel(%arg0: i32, %arg1: memref<5xf32, #tpu.memory_space<smem>>, %arg2: memref<4x128xf32, #tpu.memory_space<vmem>>, %arg3: memref<4x128xf32, #tpu.memory_space<vmem>>, %arg4: memref<4x128xf32, #tpu.memory_space<vmem>>, %arg5: memref<4x128xf32, #tpu.memory_space<vmem>>, %arg6: memref<4x128xf32, #tpu.memory_space<vmem>>) attributes {dimension_semantics = [#tpu.dimension_semantics<parallel>], iteration_bounds = array<i64: 1>, scalar_prefetch = 0 : i64, scratch_operands = 0 : i64, tpu.core_type = #tpu.core_type<tc>, window_params = [{transform_indices = @transform_0, window_bounds = array<i64: 5>}, {transform_indices = @transform_1, window_bounds = array<i64: 4, 128>}, {transform_indices = @transform_2, window_bounds = array<i64: 4, 128>}, {transform_indices = @transform_3, window_bounds = array<i64: 4, 128>}, {transform_indices = @transform_4, window_bounds = array<i64: 4, 128>}, {transform_indices = @transform_5, window_bounds = array<i64: 4, 128>}]} {
    %c4 = arith.constant 4 : index
    %0 = memref.load %arg1[%c4] : memref<5xf32, #tpu.memory_space<smem>>
    %1 = vector.broadcast %0 : f32 to vector<4x128xf32>
    %c0 = arith.constant 0 : index
    %2 = memref.load %arg1[%c0] : memref<5xf32, #tpu.memory_space<smem>>
    %c0_0 = arith.constant 0 : index
    %c0_1 = arith.constant 0 : index
    %3 = vector.load %arg2[%c0_0, %c0_1] : memref<4x128xf32, #tpu.memory_space<vmem>>, vector<4x128xf32>
    %4 = vector.broadcast %2 : f32 to vector<4x128xf32>
    %5 = arith.mulf %4, %3 : vector<4x128xf32>
    %6 = arith.addf %1, %5 : vector<4x128xf32>
    %c1 = arith.constant 1 : index
    %7 = memref.load %arg1[%c1] : memref<5xf32, #tpu.memory_space<smem>>
    %c0_2 = arith.constant 0 : index
    %c0_3 = arith.constant 0 : index
    %8 = vector.load %arg3[%c0_2, %c0_3] : memref<4x128xf32, #tpu.memory_space<vmem>>, vector<4x128xf32>
    %9 = vector.broadcast %7 : f32 to vector<4x128xf32>
    %10 = arith.mulf %9, %8 : vector<4x128xf32>
    %11 = arith.addf %6, %10 : vector<4x128xf32>
    %c2 = arith.constant 2 : index
    %12 = memref.load %arg1[%c2] : memref<5xf32, #tpu.memory_space<smem>>
    %c0_4 = arith.constant 0 : index
    %c0_5 = arith.constant 0 : index
    %13 = vector.load %arg4[%c0_4, %c0_5] : memref<4x128xf32, #tpu.memory_space<vmem>>, vector<4x128xf32>
    %14 = vector.broadcast %12 : f32 to vector<4x128xf32>
    %15 = arith.mulf %14, %13 : vector<4x128xf32>
    %16 = arith.addf %11, %15 : vector<4x128xf32>
    %c3 = arith.constant 3 : index
    %17 = memref.load %arg1[%c3] : memref<5xf32, #tpu.memory_space<smem>>
    %c0_6 = arith.constant 0 : index
    %c0_7 = arith.constant 0 : index
    %18 = vector.load %arg5[%c0_6, %c0_7] : memref<4x128xf32, #tpu.memory_space<vmem>>, vector<4x128xf32>
    %19 = vector.broadcast %17 : f32 to vector<4x128xf32>
    %20 = arith.mulf %19, %18 : vector<4x128xf32>
    %21 = arith.addf %16, %20 : vector<4x128xf32>
    %c0_8 = arith.constant 0 : index
    %c0_9 = arith.constant 0 : index
    %22 = vector.load %arg6[%c0_8, %c0_9] : memref<4x128xf32, #tpu.memory_space<vmem>>, vector<4x128xf32>
    tpu.vector_store %arg6[%c0_8, %c0_9], %21 {strides = array<i32>} : memref<4x128xf32, #tpu.memory_space<vmem>>, vector<4x128xf32>,
    return
  }
  func.func @transform_0(%arg0: i32) -> i32 {
    %c0_i32 = arith.constant 0 : i32
    %c0_i32_0 = arith.constant 0 : i32
    return %c0_i32 : i32
  }
  func.func @transform_1(%arg0: i32) -> (i32, i32) {
    %c0_i32 = arith.constant 0 : i32
    %c0_i32_0 = arith.constant 0 : i32
    return %arg0, %c0_i32 : i32, i32
  }
  func.func @transform_2(%arg0: i32) -> (i32, i32) {
    %c0_i32 = arith.constant 0 : i32
    %c0_i32_0 = arith.constant 0 : i32
    return %arg0, %c0_i32 : i32, i32
  }
  func.func @transform_3(%arg0: i32) -> (i32, i32) {
    %c0_i32 = arith.constant 0 : i32
    %c0_i32_0 = arith.constant 0 : i32
    return %arg0, %c0_i32 : i32, i32
  }
  func.func @transform_4(%arg0: i32) -> (i32, i32) {
    %c0_i32 = arith.constant 0 : i32
    %c0_i32_0 = arith.constant 0 : i32
    return %arg0, %c0_i32 : i32, i32
  }
  func.func @transform_5(%arg0: i32) -> (i32, i32) {
    %c0_i32 = arith.constant 0 : i32
    %c0_i32_0 = arith.constant 0 : i32
    return %arg0, %c0_i32 : i32, i32
  }
}

</mosaic_0001>

<llo_original>
// kernel: tpu_custom_call.1
$region0: #{tpu_custom_call.1}
  #allocation0 [shape = 'u32[]', space=smem, size = 0x4, offset = 0x4, fixed_abs, tag = 'smem constant byte address 0x4 - core index']
  #allocation1 [shape = 'u32[144,128]{1,0:T(1,128)}', space=vmem, size = 0x12000, scoped, tag = 'internal scratch']
  %s0 = inlined_call_operand.hbm [shape: f32[5], index: 0, kind: input, shape index: {}]
  %s1 = inlined_call_operand.hbm [shape: f32[4,128], index: 1, kind: input, shape index: {}]
  %s2 = inlined_call_operand.hbm [shape: f32[4,128], index: 2, kind: input, shape index: {}]
  %s3 = inlined_call_operand.vmem [shape: f32[4,128], index: 3, kind: input, shape index: {}]
  %s4 = inlined_call_operand.hbm [shape: f32[4,128], index: 4, kind: input, shape index: {}]
  %s5 = inlined_call_operand.hbm [shape: f32[4,128], index: 5, kind: output, shape index: {}]
  %s6 = sld [smem:[#allocation0]]
  $region46: #{tpu_custom_call.1} parent=0
    _
  %s8 = ssub.s32 1, %s6
  %s9 = scalar_select 0, %s8, %s6
  $region1: #{tpu_custom_call.1} parent=0
    #allocation2 [shape = 'u8[512]{0}', space=smem, size = 0x200, scoped, tag = 'input window, operand 0, single buffered']
    #allocation3 [shape = 's32[1]{0}', space=sflag, size = 0x4, scoped, tag = 'scoped memory for tpu_custom_call.1']
    #allocation4 [shape = 's32[1]{0}', space=sflag, size = 0x4, scoped, tag = 'scoped memory for tpu_custom_call.1']
    #allocation5 [shape = 's32[1]{0}', space=sflag, size = 0x4, scoped, tag = 'scoped memory for tpu_custom_call.1']
    #allocation6 [shape = 'u8[2048]{0}', space=vmem, size = 0x800, scoped, tag = 'input window, operand 1, single buffered']
    #allocation7 [shape = 'u8[2048]{0}', space=vmem, size = 0x800, scoped, tag = 'input window, operand 2, single buffered']
    #allocation8 [shape = 's32[1]{0}', space=sflag, size = 0x4, scoped, tag = 'scoped memory for tpu_custom_call.1']
    #allocation9 [shape = 'u8[2048]{0}', space=vmem, size = 0x800, scoped, tag = 'input window, operand 4, single buffered']
    #allocation10 [shape = 'u8[2048]{0}', space=vmem, size = 0x800, scoped, tag = 'output window, operand 0, single buffered']
    %10 = vsyncpa [#allocation5], 0
    %11 = vsyncpa [#allocation3], 0
    %12 = vsyncpa [#allocation8], 0
    %13 = vsyncpa [#allocation4], 0
    // Predicated region
    $region2: #{tpu_custom_call.1} parent=1 // pred_check
      _
    $region3: #{tpu_custom_call.1} parent=1 // pred_check_branch
      %15 = sbr.rel (0) target = $region5
    $region4: #{tpu_custom_call.1} parent=1 // pred_region
      %s17 = ssub.s32 16, 16
      %18 = vsyncadd [#allocation5], %s17
      %21 = dma.hbm_to_smem %s0, 16, [#allocation2], [#allocation5]
    $region5: #{tpu_custom_call.1} parent=1 // pred_fallthru
      _
    // Predicated region
    $region6: #{tpu_custom_call.1} parent=1 // pred_check
      _
    $region7: #{tpu_custom_call.1} parent=1 // pred_check_branch
      %23 = sbr.rel (0) target = $region9
    $region8: #{tpu_custom_call.1} parent=1 // pred_region
      %s25 = ssub.s32 64, 64
      %26 = vsyncadd [#allocation3], %s25
      %s28 = sshll.u32 [#allocation6], 4
      %s29 = int_to_ptr.vmem [resolvable:$true] %s28
      %31 = dma.hbm_to_vmem [thread:$0]  %s1, 64, %s29, [#allocation3]
    $region9: #{tpu_custom_call.1} parent=1 // pred_fallthru
      _
    // Predicated region
    $region10: #{tpu_custom_call.1} parent=1 // pred_check
      _
    $region11: #{tpu_custom_call.1} parent=1 // pred_check_branch
      %33 = sbr.rel (0) target = $region13
    $region12: #{tpu_custom_call.1} parent=1 // pred_region
      %s35 = ssub.s32 64, 64
      %36 = vsyncadd [#allocation8], %s35
      %s38 = sshll.u32 [#allocation7], 4
      %s39 = int_to_ptr.vmem [resolvable:$true] %s38
      %41 = dma.hbm_to_vmem [thread:$0]  %s2, 64, %s39, [#allocation8]
    $region13: #{tpu_custom_call.1} parent=1 // pred_fallthru
      _
    // Predicated region
    $region14: #{tpu_custom_call.1} parent=1 // pred_check
      _
    $region15: #{tpu_custom_call.1} parent=1 // pred_check_branch
      %43 = sbr.rel (0) target = $region17
    $region16: #{tpu_custom_call.1} parent=1 // pred_region
      _
    $region17: #{tpu_custom_call.1} parent=1 // pred_fallthru
      _
    // Predicated region
    $region18: #{tpu_custom_call.1} parent=1 // pred_check
      _
    $region19: #{tpu_custom_call.1} parent=1 // pred_check_branch
      %45 = sbr.rel (0) target = $region21
    $region20: #{tpu_custom_call.1} parent=1 // pred_region
      %s47 = ssub.s32 64, 64
      %48 = vsyncadd [#allocation8], %s47
      %s50 = sshll.u32 [#allocation9], 4
      %s51 = int_to_ptr.vmem [resolvable:$true] %s50
      %53 = dma.hbm_to_vmem [thread:$0]  %s4, 64, %s51, [#allocation8]
    $region21: #{tpu_custom_call.1} parent=1 // pred_fallthru
      _
    // Predicated region
    $region22: #{tpu_custom_call.1} parent=1 // pred_check
      _
    $region23: #{tpu_custom_call.1} parent=1 // pred_check_branch
      %55 = sbr.rel (0) target = $region25
    $region24: #{tpu_custom_call.1} parent=1 // pred_region
      %56 = dma.done [#allocation5], 16
    $region25: #{tpu_custom_call.1} parent=1 // pred_fallthru
      _
    // Predicated region
    $region26: #{tpu_custom_call.1} parent=1 // pred_check
      _
    $region27: #{tpu_custom_call.1} parent=1 // pred_check_branch
      %58 = sbr.rel (0) target = $region29
    $region28: #{tpu_custom_call.1} parent=1 // pred_region
      %59 = dma.done [#allocation3], 64
    $region29: #{tpu_custom_call.1} parent=1 // pred_fallthru
      _
    // Predicated region
    $region30: #{tpu_custom_call.1} parent=1 // pred_check
      _
    $region31: #{tpu_custom_call.1} parent=1 // pred_check_branch
      %61 = sbr.rel (0) target = $region33
    $region32: #{tpu_custom_call.1} parent=1 // pred_region
      %62 = dma.done [#allocation8], 64
    $region33: #{tpu_custom_call.1} parent=1 // pred_fallthru
      _
    // Predicated region
    $region34: #{tpu_custom_call.1} parent=1 // pred_check
      _
    $region35: #{tpu_custom_call.1} parent=1 // pred_check_branch
      %64 = sbr.rel (0) target = $region37
    $region36: #{tpu_custom_call.1} parent=1 // pred_region
      %65 = dma.done [#allocation8], 64
    $region37: #{tpu_custom_call.1} parent=1 // pred_fallthru
      _
    %66 = sfence
    %s67 = sld [smem:[#allocation2 + $0x4]]
    %v68 = vstv %s67
    %s69 = sld [smem:[#allocation2]]
    %v70 = vld [vmem:[#allocation6] sm:$0xf]
    %v71 = vstv %s69
    %v72 = vmul.f32 %v71, %v70
    %v73 = vadd.f32 %v68, %v72
    %s74 = sld [smem:[#allocation2 + $0x1]]
    %v75 = vld [vmem:[#allocation7] sm:$0xf]
    %v76 = vstv %s74
    %v77 = vmul.f32 %v76, %v75
    %v78 = vadd.f32 %v73, %v77
    %s79 = sld [smem:[#allocation2 + $0x2]]
    %v80 = vld [vmem:[%s3] sm:$0xf]
    %v81 = vstv %s79
    %v82 = vmul.f32 %v81, %v80
    %v83 = vadd.f32 %v78, %v82
    %s84 = sld [smem:[#allocation2 + $0x3]]
    %v85 = vld [vmem:[#allocation9] sm:$0xf]
    %v86 = vstv %s84
    %v87 = vmul.f32 %v86, %v85
    %v88 = vadd.f32 %v83, %v87
    %89 = vst [vmem:[#allocation10] sm:$0xf] %v88
    // Predicated region
    $region38: #{tpu_custom_call.1} parent=1 // pred_check
      _
    $region39: #{tpu_custom_call.1} parent=1 // pred_check_branch
      %91 = sbr.rel (0) target = $region41
    $region40: #{tpu_custom_call.1} parent=1 // pred_region
      %s93 = ssub.s32 64, 64
      %94 = vsyncadd [#allocation4], %s93
      %s96 = sshll.u32 [#allocation10], 4
      %s97 = int_to_ptr.vmem [resolvable:$true] %s96
      %99 = dma.vmem_to_hbm [thread:$0]  %s97, 64, %s5, [#allocation4]
    $region41: #{tpu_custom_call.1} parent=1 // pred_fallthru
      _
    // Predicated region
    $region42: #{tpu_custom_call.1} parent=1 // pred_check
      _
    $region43: #{tpu_custom_call.1} parent=1 // pred_check_branch
      %101 = sbr.rel (0) target = $region45
    $region44: #{tpu_custom_call.1} parent=1 // pred_region
      %102 = dma.done [#allocation4], 64
    $region45: #{tpu_custom_call.1} parent=1 // pred_fallthru
      _
    %103 = vsyncpa [#allocation3], 1
    %104 = vsyncpa [#allocation8], 1
    %105 = vsyncpa [#allocation4], 1
    %106 = vsyncpa [#allocation5], 1

</llo_original>
